<compile_context>
chip_gen: v7x
topology: tpu7x:2x2x1
jax: 0.10.0
libtpu: 0.0.40
codegen_flags: <defaults>
</compile_context>

<pallas_src>
import functools

import jax
import jax.numpy as jnp
from jax.experimental import pallas as pl
from jax.experimental.pallas import tpu as pltpu


def _round_up(x, m):
    return (x + m - 1) // m * m


def neural_io_kernel(phi_t_ref, w1_ref, b1_ref, w2_ref, const_ref, b2_ref, out_ref):
    """Fused MLP + linear-term kernel (transposed layout, batch on lanes).

    phi_t_ref : (n_in, TB)    f32   batch tile of phi^T
    w1_ref    : (n_feat, n_in) f32  torch Linear1.weight (out, in)
    b1_ref    : (n_feat, 1)   f32   Linear1.bias as a column
    w2_ref    : (n_feat, 1)   f32   Linear2.weight^T as a column
    const_ref : (n_in, 1)     f32   e_0 selector column
    b2_ref    : (1,)          f32   Linear2.bias (SMEM scalar)
    out_ref   : (1, TB)       f32   Y^T tile (lane-dense)
    """
    phi_t = phi_t_ref[...]                                           # (n_in, TB)

    # h^T = ReLU(W1 @ phi^T + b1)  -> (n_feat, TB); MXU with lane-dense N=TB.
    h = jnp.dot(w1_ref[...], phi_t, preferred_element_type=jnp.float32)
    h = jnp.maximum(h + b1_ref[...], 0.0)

    # N=1 contractions kept off the MXU: VPU broadcast-mul + sublane reduce.
    y_net = jnp.sum(h * w2_ref[...], axis=0, keepdims=True)          # (1, TB)
    y_lin = jnp.sum(phi_t * const_ref[...], axis=0, keepdims=True)   # (1, TB)

    out_ref[...] = y_net + y_lin + b2_ref[0]


@functools.partial(jax.jit, static_argnames=("tb",))
def neural_io_forward(phi, w1, b1, w2, b2, const, *, tb=1024):
    """phi: (B, n_in); w1: (n_feat, n_in); b1: (n_feat,); w2: (1, n_feat);
    b2: (1,); const: (n_in, 1). Returns (B, 1)."""
    B, n_in = phi.shape
    n_feat = w1.shape[0]

    # Batch tile: multiple of 128 (lane width), capped by `tb`; pad B up to it.
    TB = min(tb, _round_up(B, 128))
    Bp = _round_up(B, TB)
    num_tiles = Bp // TB

    # Layout plumbing in the wrapper: batch onto the lane axis, zero-pad tail.
    phi_t = jnp.pad(phi.astype(jnp.float32).T, ((0, 0), (0, Bp - B)))  # (n_in, Bp)
    b1_col = b1.astype(jnp.float32).reshape(n_feat, 1)
    w2_col = w2.astype(jnp.float32).reshape(1, n_feat).T               # (n_feat, 1)
    const_col = const.astype(jnp.float32).reshape(n_in, 1)
    b2_smem = jnp.asarray(b2, jnp.float32).reshape(1)

    out = pl.pallas_call(
        neural_io_kernel,
        out_shape=jax.ShapeDtypeStruct((1, Bp), jnp.float32),
        grid_spec=pltpu.PrefetchScalarGridSpec(
            num_scalar_prefetch=0,
            grid=(num_tiles,),
            in_specs=[
                # phi^T tile: lane-dense batch slab, pipelined over the grid.
                pl.BlockSpec((n_in, TB), lambda i: (0, i)),
                # Weights / biases: VMEM-resident (same block every step).
                pl.BlockSpec((n_feat, n_in), lambda i: (0, 0)),
                pl.BlockSpec((n_feat, 1), lambda i: (0, 0)),
                pl.BlockSpec((n_feat, 1), lambda i: (0, 0)),
                pl.BlockSpec((n_in, 1), lambda i: (0, 0)),
                # Scalar bias in SMEM.
                pl.BlockSpec(memory_space=pltpu.MemorySpace.SMEM),
            ],
            out_specs=pl.BlockSpec((1, TB), lambda i: (0, i)),
        ),
        compiler_params=pltpu.CompilerParams(
            dimension_semantics=("parallel",),  # shard batch tiles across TCs (v7x)
        ),
    )(phi_t, w1.astype(jnp.float32), b1_col, w2_col, const_col, b2_smem)

    return out[0, :B].reshape(B, 1)


def make_params(key, n_a, n_b, n_feat, small_init=True):
    """Parameters in native torch layouts: Linear.weight is (out, in)."""
    n_in = n_a + n_b
    k1, k2, k3, k4 = jax.random.split(key, 4)
    if small_init:
        w1 = jax.random.normal(k1, (n_feat, n_in), jnp.float32) * 1e-4
        b1 = jnp.zeros((n_feat,), jnp.float32)
        w2 = jax.random.normal(k2, (1, n_feat), jnp.float32) * 1e-4
        b2 = jnp.zeros((1,), jnp.float32)
    else:
        w1 = jax.random.normal(k1, (n_feat, n_in), jnp.float32) * 0.5
        b1 = jax.random.uniform(k3, (n_feat,), jnp.float32, -0.5, 0.5)
        w2 = jax.random.normal(k2, (1, n_feat), jnp.float32) * 0.5
        b2 = jax.random.uniform(k4, (1,), jnp.float32, -0.5, 0.5)
    const = jnp.zeros((n_in, 1), jnp.float32).at[0, 0].set(1.0)
    return w1, b1, w2, b2, const


def reference_forward(phi, w1, b1, w2, b2, const):
    h = jnp.maximum(phi @ w1.T + b1, 0.0)
    return h @ w2.T + b2 + phi @ const


if __name__ == "__main__":
    n_a, n_b, n_feat = 2, 2, 32
    key = jax.random.PRNGKey(0)
    k_params, k_phi1, k_phi2 = jax.random.split(key, 3)

    # Case 1: module-sized small batch, non-trivial weights/biases.
    w1, b1, w2, b2, const = make_params(k_params, n_a, n_b, n_feat, small_init=False)
    phi = jax.random.normal(k_phi1, (8, n_a + n_b), dtype=jnp.float32)
    y = jax.block_until_ready(neural_io_forward(phi, w1, b1, w2, b2, const))
    y_ref = reference_forward(phi, w1, b1, w2, b2, const)
    assert y.shape == (8, 1)
    assert jnp.allclose(y, y_ref, atol=1e-4, rtol=1e-4)

    # Case 2: ragged batch spanning several grid tiles (exercises pad + grid).
    phi2 = jax.random.normal(k_phi2, (300, n_a + n_b), dtype=jnp.float32)
    y2 = jax.block_until_ready(neural_io_forward(phi2, w1, b1, w2, b2, const, tb=128))
    y2_ref = reference_forward(phi2, w1, b1, w2, b2, const)
    assert y2.shape == (300, 1)
    assert jnp.allclose(y2, y2_ref, atol=1e-4, rtol=1e-4)

    # Case 3: small_init=True path (matches torch default construction).
    w1s, b1s, w2s, b2s, consts = make_params(k_params, n_a, n_b, n_feat, small_init=True)
    y3 = jax.block_until_ready(neural_io_forward(phi, w1s, b1s, w2s, b2s, consts))
    y3_ref = reference_forward(phi, w1s, b1s, w2s, b2s, consts)
    assert jnp.allclose(y3, y3_ref, atol=1e-5, rtol=1e-5)

    print("KERNEL_OK")
</pallas_src>

<mosaic_0001>
module attributes {stable_mosaic.version = 11 : i64} {
  func.func @neural_io_kernel(%arg0: i32, %arg1: memref<4x128xf32, #tpu.memory_space<vmem>>, %arg2: memref<32x4xf32, #tpu.memory_space<vmem>>, %arg3: memref<32x1xf32, #tpu.memory_space<vmem>>, %arg4: memref<32x1xf32, #tpu.memory_space<vmem>>, %arg5: memref<4x1xf32, #tpu.memory_space<vmem>>, %arg6: memref<1xf32, #tpu.memory_space<smem>>, %arg7: memref<1x128xf32, #tpu.memory_space<vmem>>) attributes {dimension_semantics = [#tpu.dimension_semantics<parallel>], iteration_bounds = array<i64: 1>, scalar_prefetch = 0 : i64, scratch_operands = 0 : i64, tpu.core_type = #tpu.core_type<tc>, window_params = [{transform_indices = @transform_0, window_bounds = array<i64: 4, 128>}, {pipeline_mode = #tpu.pipeline_mode<synchronous>, transform_indices = @transform_1, window_bounds = array<i64: 32, 4>}, {pipeline_mode = #tpu.pipeline_mode<synchronous>, transform_indices = @transform_2, window_bounds = array<i64: 32, 1>}, {pipeline_mode = #tpu.pipeline_mode<synchronous>, transform_indices = @transform_3, window_bounds = array<i64: 32, 1>}, {pipeline_mode = #tpu.pipeline_mode<synchronous>, transform_indices = @transform_4, window_bounds = array<i64: 4, 1>}, {transform_indices = @transform_5, window_bounds = array<i64: 1>}, {transform_indices = @transform_6, window_bounds = array<i64: 1, 128>}]} {
    %c0 = arith.constant 0 : index
    %c0_0 = arith.constant 0 : index
    %0 = vector.load %arg1[%c0, %c0_0] : memref<4x128xf32, #tpu.memory_space<vmem>>, vector<4x128xf32>
    %c0_1 = arith.constant 0 : index
    %c0_2 = arith.constant 0 : index
    %1 = vector.load %arg2[%c0_1, %c0_2] : memref<32x4xf32, #tpu.memory_space<vmem>>, vector<32x4xf32>
    %cst = arith.constant dense<0.000000e+00> : vector<32x128xf32>
    %2 = tpu.matmul %1, %0, %cst {dimension_numbers = #tpu.dot_dimension_numbers<[1], [0], [0], [1], [0, 0, 1, 1], [], []>} : vector<32x4xf32>, vector<4x128xf32>, vector<32x128xf32> -> vector<32x128xf32>
    %c0_3 = arith.constant 0 : index
    %c0_4 = arith.constant 0 : index
    %3 = vector.load %arg3[%c0_3, %c0_4] : memref<32x1xf32, #tpu.memory_space<vmem>>, vector<32x1xf32>
    %4 = vector.broadcast %3 : vector<32x1xf32> to vector<32x128xf32>
    %5 = arith.addf %2, %4 : vector<32x128xf32>
    %cst_5 = arith.constant 0.000000e+00 : f32
    %6 = vector.broadcast %cst_5 : f32 to vector<32x128xf32>
    %7 = arith.maximumf %5, %6 : vector<32x128xf32>
    %c0_6 = arith.constant 0 : index
    %c0_7 = arith.constant 0 : index
    %8 = vector.load %arg4[%c0_6, %c0_7] : memref<32x1xf32, #tpu.memory_space<vmem>>, vector<32x1xf32>
    %9 = vector.broadcast %8 : vector<32x1xf32> to vector<32x128xf32>
    %10 = arith.mulf %7, %9 : vector<32x128xf32>
    %cst_8 = arith.constant dense<0.000000e+00> : vector<128xf32>
    %11 = vector.multi_reduction <add>, %10, %cst_8 [0] : vector<32x128xf32> to vector<128xf32>
    %12 = vector.shape_cast %11 : vector<128xf32> to vector<1x128xf32>
    %c0_9 = arith.constant 0 : index
    %c0_10 = arith.constant 0 : index
    %13 = vector.load %arg5[%c0_9, %c0_10] : memref<4x1xf32, #tpu.memory_space<vmem>>, vector<4x1xf32>
    %14 = vector.broadcast %13 : vector<4x1xf32> to vector<4x128xf32>
    %15 = arith.mulf %0, %14 : vector<4x128xf32>
    %cst_11 = arith.constant dense<0.000000e+00> : vector<128xf32>
    %16 = vector.multi_reduction <add>, %15, %cst_11 [0] : vector<4x128xf32> to vector<128xf32>
    %17 = vector.shape_cast %16 : vector<128xf32> to vector<1x128xf32>
    %18 = arith.addf %12, %17 : vector<1x128xf32>
    %c0_12 = arith.constant 0 : index
    %19 = memref.load %arg6[%c0_12] : memref<1xf32, #tpu.memory_space<smem>>
    %20 = vector.broadcast %19 : f32 to vector<1x128xf32>
    %21 = arith.addf %18, %20 : vector<1x128xf32>
    %c0_13 = arith.constant 0 : index
    %c0_14 = arith.constant 0 : index
    %22 = vector.load %arg7[%c0_13, %c0_14] : memref<1x128xf32, #tpu.memory_space<vmem>>, vector<1x128xf32>
    tpu.vector_store %arg7[%c0_13, %c0_14], %21 {strides = array<i32>} : memref<1x128xf32, #tpu.memory_space<vmem>>, vector<1x128xf32>,
    return
  }
  func.func @transform_0(%arg0: i32) -> (i32, i32) {
    %c0_i32 = arith.constant 0 : i32
    %c0_i32_0 = arith.constant 0 : i32
    return %c0_i32, %arg0 : i32, i32
  }
  func.func @transform_1(%arg0: i32) -> (i32, i32) {
    %c0_i32 = arith.constant 0 : i32
    %c0_i32_0 = arith.constant 0 : i32
    %c0_i32_1 = arith.constant 0 : i32
    return %c0_i32, %c0_i32_0 : i32, i32
  }
  func.func @transform_2(%arg0: i32) -> (i32, i32) {
    %c0_i32 = arith.constant 0 : i32
    %c0_i32_0 = arith.constant 0 : i32
    %c0_i32_1 = arith.constant 0 : i32
    return %c0_i32, %c0_i32_0 : i32, i32
  }
  func.func @transform_3(%arg0: i32) -> (i32, i32) {
    %c0_i32 = arith.constant 0 : i32
    %c0_i32_0 = arith.constant 0 : i32
    %c0_i32_1 = arith.constant 0 : i32
    return %c0_i32, %c0_i32_0 : i32, i32
  }
  func.func @transform_4(%arg0: i32) -> (i32, i32) {
    %c0_i32 = arith.constant 0 : i32
    %c0_i32_0 = arith.constant 0 : i32
    %c0_i32_1 = arith.constant 0 : i32
    return %c0_i32, %c0_i32_0 : i32, i32
  }
  func.func @transform_5(%arg0: i32) -> i32 {
    %c0_i32 = arith.constant 0 : i32
    %c0_i32_0 = arith.constant 0 : i32
    return %c0_i32 : i32
  }
  func.func @transform_6(%arg0: i32) -> (i32, i32) {
    %c0_i32 = arith.constant 0 : i32
    %c0_i32_0 = arith.constant 0 : i32
    return %c0_i32, %arg0 : i32, i32
  }
}

</mosaic_0001>

<llo_original>
// kernel: neural_io_forward.1
$region0: #{neural_io_forward.1}
  #allocation0 [shape = 'u32[]', space=smem, size = 0x4, offset = 0x4, fixed_abs, tag = 'smem constant byte address 0x4 - core index']
  #allocation1 [shape = 'u32[144,128]{1,0:T(1,128)}', space=vmem, size = 0x12000, scoped, tag = 'internal scratch']
  #allocation2 [shape = 'f32[1]{0:T(128)S(6)}', space=smem, size = 0x200, scoped, tag = 'scoped memory for neural_io_forward.1']
  %s0 = inlined_call_operand.vmem [shape: f32[4,128], index: 0, kind: input, shape index: {}]
  %s1 = inlined_call_operand.vmem [shape: f32[32,4], index: 1, kind: input, shape index: {}]
  %s2 = inlined_call_operand.vmem [shape: f32[32,1], index: 2, kind: input, shape index: {}]
  %s3 = inlined_call_operand.vmem [shape: f32[32,1], index: 3, kind: input, shape index: {}]
  %s4 = inlined_call_operand.vmem [shape: f32[4,1], index: 4, kind: input, shape index: {}]
  %s5 = inlined_call_operand.<no memory space> [shape: f32[1], index: 5, kind: input, shape index: {}]
  %s6 = inlined_call_operand.vmem [shape: f32[1,128], index: 6, kind: output, shape index: {}]
  %s7 = sld [smem:[#allocation0]]
  $region34: #{neural_io_forward.1} parent=0
    _
  %s9 = ssub.s32 1, %s7
  %s10 = scalar_select 0, %s9, %s7
  %11 = sst [smem:[#allocation2]] %s5
  // Predicated region
  $region2: #{neural_io_forward.1} parent=0 // pred_check
    _
  $region3: #{neural_io_forward.1} parent=0 // pred_check_branch
    %13 = sbr.rel (0) target = $region5
  $region4: #{neural_io_forward.1} parent=0 // pred_region
    _
  $region5: #{neural_io_forward.1} parent=0 // pred_fallthru
    _
  // Predicated region
  $region6: #{neural_io_forward.1} parent=0 // pred_check
    _
  $region7: #{neural_io_forward.1} parent=0 // pred_check_branch
    %15 = sbr.rel (0) target = $region9
  $region8: #{neural_io_forward.1} parent=0 // pred_region
    _
  $region9: #{neural_io_forward.1} parent=0 // pred_fallthru
    _
  // Predicated region
  $region10: #{neural_io_forward.1} parent=0 // pred_check
    _
  $region11: #{neural_io_forward.1} parent=0 // pred_check_branch
    %17 = sbr.rel (0) target = $region13
  $region12: #{neural_io_forward.1} parent=0 // pred_region
    _
  $region13: #{neural_io_forward.1} parent=0 // pred_fallthru
    _
  // Predicated region
  $region14: #{neural_io_forward.1} parent=0 // pred_check
    _
  $region15: #{neural_io_forward.1} parent=0 // pred_check_branch
    %19 = sbr.rel (0) target = $region17
  $region16: #{neural_io_forward.1} parent=0 // pred_region
    _
  $region17: #{neural_io_forward.1} parent=0 // pred_fallthru
    _
  // Predicated region
  $region18: #{neural_io_forward.1} parent=0 // pred_check
    _
  $region19: #{neural_io_forward.1} parent=0 // pred_check_branch
    %21 = sbr.rel (0) target = $region21
  $region20: #{neural_io_forward.1} parent=0 // pred_region
    _
  $region21: #{neural_io_forward.1} parent=0 // pred_fallthru
    _
  // Predicated region
  $region22: #{neural_io_forward.1} parent=0 // pred_check
    _
  $region23: #{neural_io_forward.1} parent=0 // pred_check_branch
    %23 = sbr.rel (0) target = $region25
  $region24: #{neural_io_forward.1} parent=0 // pred_region
    _
  $region25: #{neural_io_forward.1} parent=0 // pred_fallthru
    _
  %v24 = vld [vmem:[%s0] sm:$0xf]
  %v25 = vld [vmem:[%s1] sm:$0xff]
  %v26 = vld [vmem:[%s1 + $0x8] sm:$0xff]
  %v27 = vld [vmem:[%s1 + $0x10] sm:$0xff]
  %v28 = vld [vmem:[%s1 + $0x18] sm:$0xff]
  %v29 = vld [vmem:[%s2] sm:$0xff]
  %v30 = vld [vmem:[%s2 + $0x8] sm:$0xff]
  %v31 = vld [vmem:[%s2 + $0x10] sm:$0xff]
  %v32 = vld [vmem:[%s2 + $0x18] sm:$0xff]
  %34 = vset.pattern.permute.xlu0 0
  %35 = vperm.xlu0 %34, %v29
  %v36 = vpop.permute.xlu0 %35
  %39 = vset.pattern.permute.xlu0 0
  %40 = vperm.xlu0 %39, %v30
  %v41 = vpop.permute.xlu0 %40
  %44 = vset.pattern.permute.xlu0 0
  %45 = vperm.xlu0 %44, %v31
  %v46 = vpop.permute.xlu0 %45
  %49 = vset.pattern.permute.xlu0 0
  %50 = vperm.xlu0 %49, %v32
  %v51 = vpop.permute.xlu0 %50
  %vm53 = vcmask 31744
  %v55 = vsel %vm53, %v25, 0
  %v58 = vsel %vm53, %v26, 0
  %v61 = vsel %vm53, %v27, 0
  %v64 = vsel %vm53, %v28, 0
  %vm66 = vcmask 1043456
  %v68 = vsel %vm66, %v24, 0
  %70 = vmatprep.subr.mxu0 0.0
  %71 = vmatpush1.msra.mxu0 %v68
  %72 = vmatprep.subr.mxu0 0.0
  %73 = vmatpush1.msra.mxu0 0.0
  %74 = vmatprep.subr.mxu0 0.0
  %75 = vmatpush1.msra.mxu0 0.0
  %76 = vmatprep.subr.mxu0 0.0
  %77 = vmatpush1.msra.mxu0 0.0
  %78 = vmatprep.subr.mxu0 0.0
  %79 = vmatpush1.msra.mxu0 0.0
  %80 = vmatprep.subr.mxu0 0.0
  %81 = vmatpush1.msra.mxu0 0.0
  %82 = vmatprep.subr.mxu0 0.0
  %83 = vmatpush1.msra.mxu0 0.0
  %84 = vmatprep.subr.mxu0 0.0
  %85 = vmatpush1.msra.mxu0 0.0
  %86 = vmatprep.subr.mxu0 0.0
  %87 = vmatpush1.msra.mxu0 0.0
  %88 = vmatprep.subr.mxu0 0.0
  %89 = vmatpush1.msra.mxu0 0.0
  %90 = vmatprep.subr.mxu0 0.0
  %91 = vmatpush1.msra.mxu0 0.0
  %92 = vmatprep.subr.mxu0 0.0
  %93 = vmatpush1.msra.mxu0 0.0
  %94 = vmatprep.subr.mxu0 0.0
  %95 = vmatpush1.msra.mxu0 0.0
  %96 = vmatprep.subr.mxu0 0.0
  %97 = vmatpush1.msra.mxu0 0.0
  %98 = vmatprep.subr.mxu0 0.0
  %99 = vmatpush1.msra.mxu0 0.0
  %100 = vmatprep.subr.mxu0 0.0
  %101 = vmatpush1.msra.mxu0 0.0
  %102 = vmatprep.subr.mxu0 0.0
  %103 = vmatpush1.msra.mxu0 0.0
  %104 = vmatprep.subr.mxu0 0.0
  %105 = vmatpush1.msra.mxu0 0.0
  %106 = vmatprep.subr.mxu0 0.0
  %107 = vmatpush1.msra.mxu0 0.0
  %108 = vmatprep.subr.mxu0 0.0
  %109 = vmatpush1.msra.mxu0 0.0
  %110 = vmatprep.subr.mxu0 0.0
  %111 = vmatpush1.msra.mxu0 0.0
  %112 = vmatprep.subr.mxu0 0.0
  %113 = vmatpush1.msra.mxu0 0.0
  %114 = vmatprep.subr.mxu0 0.0
  %115 = vmatpush1.msra.mxu0 0.0
  %116 = vmatprep.subr.mxu0 0.0
  %117 = vmatpush1.msra.mxu0 0.0
  %118 = vmatprep.subr.mxu0 0.0
  %119 = vmatpush1.msra.mxu0 0.0
  %120 = vmatprep.subr.mxu0 0.0
  %121 = vmatpush1.msra.mxu0 0.0
  %122 = vmatprep.subr.mxu0 0.0
  %123 = vmatpush1.msra.mxu0 0.0
  %124 = vmatprep.subr.mxu0 0.0
  %125 = vmatpush1.msra.mxu0 0.0
  %126 = vmatprep.subr.mxu0 0.0
  %127 = vmatpush1.msra.mxu0 0.0
  %128 = vmatprep.subr.mxu0 0.0
  %129 = vmatpush1.msra.mxu0 0.0
  %130 = vmatprep.subr.mxu0 0.0
  %131 = vmatpush1.msra.mxu0 0.0
  %132 = vmatprep.subr.mxu0 0.0
  %133 = vmatpush1.msra.mxu0 0.0
  %134 = vmatprep.mubr.f32.mxu0 0.0
  %135 = vmatmul.mubr.f32.gmra.mrb[0].mxu0 %v55
  %v136 = vpop.f32.mrb[0].mxu0
  %v137 = vadd.f32 %v36, %v136
  %v138 = vpop.f32.mrb[0].mxu0
  %139 = vmatprep.mubr.f32.mxu0 0.0
  %140 = vmatmul.mubr.f32.gmra.mrb[0].mxu0 %v58
  %v141 = vpop.f32.mrb[0].mxu0
  %v142 = vadd.f32 %v41, %v141
  %v143 = vpop.f32.mrb[0].mxu0
  %144 = vmatprep.mubr.f32.mxu0 0.0
  %145 = vmatmul.mubr.f32.gmra.mrb[0].mxu0 %v61
  %v146 = vpop.f32.mrb[0].mxu0
  %v147 = vadd.f32 %v46, %v146
  %v148 = vpop.f32.mrb[0].mxu0
  %149 = vmatprep.mubr.f32.mxu0 0.0
  %150 = vmatmul.mubr.f32.gmra.mrb[0].mxu0 %v64
  %v151 = vpop.f32.mrb[0].mxu0
  %v152 = vadd.f32 %v51, %v151
  %v153 = vpop.f32.mrb[0].mxu0
  %154 = vdwg.mxu0
  %v155 = vmax.f32 %v137, 0.0
  %v156 = vmax.f32 %v142, 0.0
  %v157 = vmax.f32 %v147, 0.0
  %v158 = vmax.f32 %v152, 0.0
  %v159 = vld [vmem:[%s3] sm:$0xff]
  %v160 = vld [vmem:[%s3 + $0x8] sm:$0xff]
  %v161 = vld [vmem:[%s3 + $0x10] sm:$0xff]
  %v162 = vld [vmem:[%s3 + $0x18] sm:$0xff]
  %164 = vset.pattern.permute.xlu0 0
  %165 = vperm.xlu0 %164, %v159
  %v166 = vpop.permute.xlu0 %165
  %169 = vset.pattern.permute.xlu0 0
  %170 = vperm.xlu0 %169, %v160
  %v171 = vpop.permute.xlu0 %170
  %174 = vset.pattern.permute.xlu0 0
  %175 = vperm.xlu0 %174, %v161
  %v176 = vpop.permute.xlu0 %175
  %179 = vset.pattern.permute.xlu0 0
  %180 = vperm.xlu0 %179, %v162
  %v181 = vpop.permute.xlu0 %180
  %v183 = vmul.f32 %v155, %v166
  %v184 = vmul.f32 %v156, %v171
  %v185 = vmul.f32 %v157, %v176
  %v186 = vmul.f32 %v158, %v181
  %v187 = vadd.f32 %v183, %v184
  %v188 = vadd.f32 %v187, %v185
  %v189 = vadd.f32 %v188, %v186
  %v190 = vrot.slane %v189, 4
  %v191 = vadd.f32 %v189, %v190
  %v192 = vrot.slane %v191, 2
  %v193 = vadd.f32 %v191, %v192
  %v194 = vrot.slane %v193, 1
  %v195 = vadd.f32 %v193, %v194
  %v196 = vld [vmem:[%s4] sm:$0xf]
  %198 = vset.pattern.permute.xlu0 0
  %199 = vperm.xlu0 %198, %v196
  %v200 = vpop.permute.xlu0 %199
  %v202 = vmul.f32 %v24, %v200
  %v203 = vsel %vm66, %v202, 0.0
  %v204 = vrot.slane %v203, 4
  %v205 = vadd.f32 %v203, %v204
  %v206 = vrot.slane %v205, 2
  %v207 = vadd.f32 %v205, %v206
  %v208 = vrot.slane %v207, 1
  %v209 = vadd.f32 %v207, %v208
  %v210 = vadd.f32 %v195, %v209
  %s211 = sld [smem:[#allocation2]]
  %v212 = vstv %s211
  %v213 = vadd.f32 %v210, %v212
  %214 = vst [vmem:[%s6] sm:$0x1] %v213
  // Predicated region
  $region26: #{neural_io_forward.1} parent=0 // pred_check
    _
  $region27: #{neural_io_forward.1} parent=0 // pred_check_branch
    %216 = sbr.rel (0) target = $region29
  $region28: #{neural_io_forward.1} parent=0 // pred_region
    _
  $region29: #{neural_io_forward.1} parent=0 // pred_fallthru
    _
  // Predicated region
  $region30: #{neural_io_forward.1} parent=0 // pred_check
    _
  $region31: #{neural_io_forward.1} parent=0 // pred_check_branch
    %218 = sbr.rel (0) target = $region33
  $region32: #{neural_io_forward.1} parent=0 // pred_region
    _
  $region33: #{neural_io_forward.1} parent=0 // pred_fallthru
    _

</llo_original>
